<compile_context>
chip_gen: v6e
topology: v6e:2x2x1
jax: 0.10.0
libtpu: 0.0.40
codegen_flags: <defaults>
</compile_context>

<pallas_src>
import math
from functools import partial

import jax
import jax.numpy as jnp
from jax import lax
from jax.experimental import pallas as pl
from jax.experimental.pallas import tpu as pltpu


def _round_up(x: int, m: int) -> int:
    return (x + m - 1) // m * m


_MXU_GATHER_MAX_ROWS = 512     # one-hot MXU gather only when the table has <= this many rows
_MAX_OUT_TILE_BYTES = 4 << 20  # cap on the (TM, D) output tile
_MXU_TILE_ROWS_MAX = 256       # fills a 256x256 MXU pass (2 passes of 128 on v5e)
_DMA_TILE_ROWS_MAX = 128       # concurrent local VMEM->VMEM row copies per grid step
_STREAM_TILE_ROWS_MAX = 64     # concurrent HBM row fetches per grid step (was 8)


def _vmem_capacity_bytes() -> int:
    try:
        return int(pltpu.get_tpu_info().vmem_capacity_bytes)
    except Exception:
        return 64 << 20  # conservative fallback (v7x per-TensorCore VMEM)


def _pick_tile_rows(n_rows: int, row_bytes: int, max_rows: int) -> int:
    by_bytes = max(8, (_MAX_OUT_TILE_BYTES // max(row_bytes, 1)) // 8 * 8)
    return int(max(8, min(max_rows, by_bytes, _round_up(n_rows, 8))))


# ---------------------------------------------------------------------------
# Path 1: one-hot MXU gather (small nb_data, table resident in VMEM).
# ---------------------------------------------------------------------------
def _mxu_gather_kernel(idx_ref, data_ref, out_ref, *, nb_rows: int):
    """out[r, :] = data[idx[r], :] via a (TM, NB) x (NB, D) matmul on the MXU."""
    tm = out_ref.shape[0]
    onehot = (
        lax.broadcasted_iota(jnp.int32, (tm, nb_rows), 1) == idx_ref[...]
    ).astype(data_ref.dtype)
    out_ref[...] = jnp.dot(
        onehot, data_ref[...], preferred_element_type=jnp.float32
    ).astype(out_ref.dtype)


# ---------------------------------------------------------------------------
# Paths 2 & 3: DMA-driven row gather straight into the output tile.
#   data_ref is either the VMEM-resident table (local VMEM->VMEM copies) or a raw
#   HBM ref (streaming path). Indices come from the SMEM scalar-prefetch ref.
# ---------------------------------------------------------------------------
def _dma_gather_kernel(idx_ref, data_ref, out_ref, copy_sems, *, tile_rows: int):
    base = pl.program_id(0) * tile_rows
    copies = []
    # Python loop unrolls at trace time; keeping the copy objects guarantees the
    # start/wait descriptors match exactly (review correctness note).
    for r in range(tile_rows):
        row = idx_ref[base + r]
        cp = pltpu.make_async_copy(data_ref.at[row], out_ref.at[r], copy_sems.at[r])
        cp.start()
        copies.append(cp)
    for cp in copies:
        cp.wait()
    # TODO(synk): streaming path could additionally double-buffer row fetches across grid
    # steps (prefetch tile t+1's rows into a (2, TM, D) scratch) to hide HBM latency.


def autoflow_forward(x: jax.Array, data: jax.Array, *, force_path: str | None = None) -> jax.Array:
    """out[b, *inter] = data[int(x[b, *inter, 0])], dtype == x.dtype."""
    assert x.shape[-1] == 1, "AutoFlow requires the last dim of x to be 1"
    assert force_path in (None, "mxu", "resident_dma", "stream")

    batch_size = x.shape[0]
    inter_size = tuple(x.shape[1:-1])
    nb_data = data.shape[0]
    output_shape = tuple(data.shape[1:])
    d_flat = int(math.prod(output_shape)) if output_shape else 1
    n_rows = batch_size * int(math.prod(inter_size))
    out_dtype = x.dtype
    itemsize = jnp.dtype(out_dtype).itemsize

    # Table prep: flatten, cast to the output dtype (matches torch copy_ semantics),
    # pad rows to a lane-dense multiple of 128.
    d_pad = _round_up(d_flat, 128)
    table = data.reshape(nb_data, d_flat)
    if table.dtype != out_dtype:
        table = table.astype(out_dtype)
    if d_pad != d_flat:
        table = jnp.pad(table, ((0, 0), (0, d_pad - d_flat)))
    table_bytes = nb_data * d_pad * itemsize

    # Generation-aware VMEM budget. The resident table block has a constant index_map so
    # it is fetched once, but it is still double-buffered by the pipeline -> budget 2x.
    # TODO(synk): single-buffer the constant table (pl.Buffered(1) / whole-array VMEM
    # placement) to halve its footprint and double the resident threshold.
    vmem_cap = _vmem_capacity_bytes()
    resident_limit = (vmem_cap * 2 // 3) // 2  # ~42 MiB on v5e/v6e, ~21 MiB on v7x

    floating = jnp.issubdtype(out_dtype, jnp.floating)
    if force_path is not None:
        path = force_path
    elif table_bytes <= resident_limit and nb_data <= _MXU_GATHER_MAX_ROWS and floating:
        path = "mxu"
    elif table_bytes <= resident_limit:
        path = "resident_dma"
    else:
        path = "stream"

    # Clamp indices (OOB blocks / DMA sources are not runtime-checked on TPU).
    indices = jnp.clip(x.reshape(n_rows).astype(jnp.int32), 0, nb_data - 1)

    max_rows = {"mxu": _MXU_TILE_ROWS_MAX,
                "resident_dma": _DMA_TILE_ROWS_MAX,
                "stream": _STREAM_TILE_ROWS_MAX}[path]
    tile_rows = _pick_tile_rows(n_rows, d_pad * itemsize, max_rows)
    n_rows_pad = _round_up(n_rows, tile_rows)
    if n_rows_pad != n_rows:
        indices = jnp.pad(indices, (0, n_rows_pad - n_rows))  # pad with valid index 0
    n_tiles = n_rows_pad // tile_rows
    out_tile_bytes = tile_rows * d_pad * itemsize

    cost = pl.CostEstimate(
        flops=0, transcendentals=0,
        bytes_accessed=int(2 * n_rows_pad * d_pad * itemsize + table_bytes + 4 * n_rows_pad),
    )

    if path == "mxu":
        # Pad the table rows to a multiple of 8 for clean sublane layout / MXU K-dim.
        nb_pad = _round_up(nb_data, 8)
        tbl = table if nb_pad == nb_data else jnp.pad(table, ((0, nb_pad - nb_data), (0, 0)))
        idx2d = indices.reshape(n_rows_pad, 1)
        kernel = partial(_mxu_gather_kernel, nb_rows=nb_pad)
        grid_spec = pltpu.PrefetchScalarGridSpec(
            num_scalar_prefetch=0,
            grid=(n_tiles,),
            in_specs=[
                pl.BlockSpec((tile_rows, 1), lambda t: (t, 0)),        # per-tile indices (VMEM)
                pl.BlockSpec((nb_pad, d_pad), lambda t: (0, 0)),       # resident table (fetched once)
            ],
            out_specs=pl.BlockSpec((tile_rows, d_pad), lambda t: (t, 0)),
        )
        vmem_need = 2 * nb_pad * d_pad * itemsize + 2 * out_tile_bytes + (4 << 20)
        args = (idx2d, tbl)
    elif path == "resident_dma":
        kernel = partial(_dma_gather_kernel, tile_rows=tile_rows)
        grid_spec = pltpu.PrefetchScalarGridSpec(
            num_scalar_prefetch=1,  # TODO(synk): per-tile SMEM index blocks for huge n_rows
            grid=(n_tiles,),
            in_specs=[pl.BlockSpec((nb_data, d_pad), lambda t, idx: (0, 0))],  # resident table
            out_specs=pl.BlockSpec((tile_rows, d_pad), lambda t, idx: (t, 0)),
            scratch_shapes=[pltpu.SemaphoreType.DMA((tile_rows,))],
        )
        vmem_need = 2 * table_bytes + 2 * out_tile_bytes + (4 << 20)
        args = (indices, table)
    else:  # "stream"
        kernel = partial(_dma_gather_kernel, tile_rows=tile_rows)
        grid_spec = pltpu.PrefetchScalarGridSpec(
            num_scalar_prefetch=1,
            grid=(n_tiles,),
            in_specs=[pl.BlockSpec(memory_space=pl.ANY)],  # table stays in HBM
            out_specs=pl.BlockSpec((tile_rows, d_pad), lambda t, idx: (t, 0)),
            scratch_shapes=[pltpu.SemaphoreType.DMA((tile_rows,))],
        )
        vmem_need = 2 * out_tile_bytes + (4 << 20)
        args = (indices, table)

    vmem_limit = int(min(vmem_cap - (2 << 20), max(vmem_need, 16 << 20)))

    out_2d = pl.pallas_call(
        kernel,
        out_shape=jax.ShapeDtypeStruct((n_rows_pad, d_pad), out_dtype),
        grid_spec=grid_spec,
        compiler_params=pltpu.CompilerParams(
            dimension_semantics=("parallel",),
            vmem_limit_bytes=vmem_limit,
        ),
        cost_estimate=cost,
    )(*args)

    if n_rows_pad != n_rows or d_pad != d_flat:
        # TODO(synk): for large pad fractions, emit an unpadded output with a lane-masked
        # tail store instead of paying this full-result slice copy.
        out_2d = out_2d[:n_rows, :d_flat]
    return out_2d.reshape((batch_size,) + inter_size + output_shape)


def make_autoflow_data(key, nb_data: int, output_shape) -> jax.Array:
    """Deterministic kaiming_uniform_(a=sqrt(5)) style init for the data param."""
    output_shape = tuple(output_shape)
    fan_in = int(math.prod(output_shape)) if output_shape else 1
    gain = math.sqrt(2.0 / (1.0 + 5.0))  # a = sqrt(5)
    bound = math.sqrt(3.0) * gain / math.sqrt(fan_in)
    return jax.random.uniform(
        key, (nb_data,) + output_shape, dtype=jnp.float32, minval=-bound, maxval=bound
    )


if __name__ == "__main__":
    key = jax.random.PRNGKey(0)
    k_data, k_idx, k_data2, k_idx2 = jax.random.split(key, 4)

    # Case 1: lane-aligned rows (D = 4*16*16 = 1024); exercises all three paths.
    nb_data, output_shape = 8, (4, 16, 16)
    batch, inter = 2, (8,)
    data = make_autoflow_data(k_data, nb_data, output_shape)
    # Round the table through bf16 so the correctness check is bit-exact regardless of how
    # many MXU passes the f32 one-hot matmul is lowered to.
    data = data.astype(jnp.bfloat16).astype(jnp.float32)
    idx_int = jax.random.randint(k_idx, (batch,) + inter + (1,), 0, nb_data)
    x = idx_int.astype(jnp.float32)
    ref = data[idx_int[..., 0]].astype(x.dtype)

    out = jax.block_until_ready(autoflow_forward(x, data))  # one-hot MXU path
    assert out.shape == (batch,) + inter + output_shape, out.shape
    assert out.dtype == x.dtype
    assert bool(jnp.allclose(out, ref)), "mxu-path mismatch vs reference gather"

    out_d = jax.block_until_ready(autoflow_forward(x, data, force_path="resident_dma"))
    assert bool(jnp.allclose(out_d, ref)), "resident-dma-path mismatch vs reference gather"

    out_s = jax.block_until_ready(autoflow_forward(x, data, force_path="stream"))
    assert bool(jnp.allclose(out_s, ref)), "streaming-path mismatch vs reference gather"

    # Case 2: D = 3*5 = 15 (not a multiple of 128) exercises lane padding + tail slice.
    nb_data2, output_shape2 = 6, (3, 5)
    batch2 = 2
    data2 = make_autoflow_data(k_data2, nb_data2, output_shape2)
    data2 = data2.astype(jnp.bfloat16).astype(jnp.float32)
    idx2 = jax.random.randint(k_idx2, (batch2, 1), 0, nb_data2)
    x2 = idx2.astype(jnp.float32)
    out2 = jax.block_until_ready(autoflow_forward(x2, data2))
    ref2 = data2[idx2[:, 0]].astype(x2.dtype)
    assert out2.shape == (batch2,) + output_shape2, out2.shape
    assert bool(jnp.allclose(out2, ref2)), "padded-D mismatch vs reference gather"

    print("KERNEL_OK")
</pallas_src>

<mosaic_0001>
module attributes {stable_mosaic.version = 11 : i64} {
  func.func @_mxu_gather_kernel(%arg0: i32, %arg1: memref<16x1xi32, #tpu.memory_space<vmem>>, %arg2: memref<8x1024xf32, #tpu.memory_space<vmem>>, %arg3: memref<16x1024xf32, #tpu.memory_space<vmem>>) attributes {dimension_semantics = [#tpu.dimension_semantics<parallel>], iteration_bounds = array<i64: 1>, scalar_prefetch = 0 : i64, scratch_operands = 0 : i64, tpu.core_type = #tpu.core_type<tc>, window_params = [{transform_indices = @transform_0, window_bounds = array<i64: 16, 1>}, {pipeline_mode = #tpu.pipeline_mode<synchronous>, transform_indices = @transform_1, window_bounds = array<i64: 8, 1024>}, {transform_indices = @transform_2, window_bounds = array<i64: 16, 1024>}]} {
    %0 = tpu.iota {dimensions = array<i32: 1>} : vector<16x8xi32>
    %c0 = arith.constant 0 : index
    %c0_0 = arith.constant 0 : index
    %1 = vector.load %arg1[%c0, %c0_0] : memref<16x1xi32, #tpu.memory_space<vmem>>, vector<16x1xi32>
    %2 = vector.broadcast %1 : vector<16x1xi32> to vector<16x8xi32>
    %3 = arith.cmpi eq, %0, %2 : vector<16x8xi32>
    %4 = arith.extui %3 : vector<16x8xi1> to vector<16x8xi32>
    %5 = arith.sitofp %4 : vector<16x8xi32> to vector<16x8xf32>
    %c0_1 = arith.constant 0 : index
    %c0_2 = arith.constant 0 : index
    %6 = vector.load %arg2[%c0_1, %c0_2] : memref<8x1024xf32, #tpu.memory_space<vmem>>, vector<8x1024xf32>
    %cst = arith.constant dense<0.000000e+00> : vector<16x1024xf32>
    %7 = tpu.matmul %5, %6, %cst {dimension_numbers = #tpu.dot_dimension_numbers<[1], [0], [0], [1], [0, 0, 1, 1], [], []>} : vector<16x8xf32>, vector<8x1024xf32>, vector<16x1024xf32> -> vector<16x1024xf32>
    %c0_3 = arith.constant 0 : index
    %c0_4 = arith.constant 0 : index
    %8 = vector.load %arg3[%c0_3, %c0_4] : memref<16x1024xf32, #tpu.memory_space<vmem>>, vector<16x1024xf32>
    tpu.vector_store %arg3[%c0_3, %c0_4], %7 {strides = array<i32>} : memref<16x1024xf32, #tpu.memory_space<vmem>>, vector<16x1024xf32>,
    return
  }
  func.func @transform_0(%arg0: i32) -> (i32, i32) {
    %c0_i32 = arith.constant 0 : i32
    %c0_i32_0 = arith.constant 0 : i32
    return %arg0, %c0_i32 : i32, i32
  }
  func.func @transform_1(%arg0: i32) -> (i32, i32) {
    %c0_i32 = arith.constant 0 : i32
    %c0_i32_0 = arith.constant 0 : i32
    %c0_i32_1 = arith.constant 0 : i32
    return %c0_i32, %c0_i32_0 : i32, i32
  }
  func.func @transform_2(%arg0: i32) -> (i32, i32) {
    %c0_i32 = arith.constant 0 : i32
    %c0_i32_0 = arith.constant 0 : i32
    return %arg0, %c0_i32 : i32, i32
  }
}

</mosaic_0001>

<llo_original>
// kernel: tpu_custom_call.1
$region0: #{tpu_custom_call.1}
  #allocation0 [shape = 'u32[]', space=smem, size = 0x4, offset = 0x4, fixed_abs, tag = 'smem constant byte address 0x4 - core index']
  #allocation1 [shape = 'u32[144,128]{1,0:T(1,128)}', space=vmem, size = 0x12000, scoped, tag = 'internal scratch']
  %s0 = inlined_call_operand.vmem [shape: s32[16,1], index: 0, kind: input, shape index: {}]
  %s1 = inlined_call_operand.hbm [shape: f32[8,1024], index: 1, kind: input, shape index: {}]
  %s2 = inlined_call_operand.hbm [shape: f32[16,1024], index: 2, kind: output, shape index: {}]
  %s3 = sld [smem:[#allocation0]]
  $region22: #{tpu_custom_call.1} parent=0
    _
  %s5 = ssub.s32 1, %s3
  %s6 = scalar_select 0, %s5, %s3
  $region1: #{tpu_custom_call.1} parent=0
    #allocation2 [shape = 'u8[32768]{0}', space=vmem, size = 0x8000, scoped, tag = 'input window, operand 1, single buffered']
    #allocation3 [shape = 's32[1]{0}', space=sflag, size = 0x4, scoped, tag = 'scoped memory for tpu_custom_call.1']
    #allocation4 [shape = 's32[1]{0}', space=sflag, size = 0x4, scoped, tag = 'scoped memory for tpu_custom_call.1']
    #allocation5 [shape = 'u8[65536]{0}', space=vmem, size = 0x10000, scoped, tag = 'output window, operand 0, single buffered']
    %7 = vsyncpa [#allocation3], 0
    %8 = vsyncpa [#allocation4], 0
    // Predicated region
    $region2: #{tpu_custom_call.1} parent=1 // pred_check
      _
    $region3: #{tpu_custom_call.1} parent=1 // pred_check_branch
      %10 = sbr.rel (0) target = $region5
    $region4: #{tpu_custom_call.1} parent=1 // pred_region
      _
    $region5: #{tpu_custom_call.1} parent=1 // pred_fallthru
      _
    // Predicated region
    $region6: #{tpu_custom_call.1} parent=1 // pred_check
      _
    $region7: #{tpu_custom_call.1} parent=1 // pred_check_branch
      %12 = sbr.rel (0) target = $region9
    $region8: #{tpu_custom_call.1} parent=1 // pred_region
      %s14 = ssub.s32 1024, 1024
      %15 = vsyncadd [#allocation3], %s14
      %s17 = sshll.u32 [#allocation2], 4
      %s18 = int_to_ptr.vmem [resolvable:$true] %s17
      %20 = dma.hbm_to_vmem [thread:$0]  %s1, 1024, %s18, [#allocation3]
    $region9: #{tpu_custom_call.1} parent=1 // pred_fallthru
      _
    // Predicated region
    $region10: #{tpu_custom_call.1} parent=1 // pred_check
      _
    $region11: #{tpu_custom_call.1} parent=1 // pred_check_branch
      %22 = sbr.rel (0) target = $region13
    $region12: #{tpu_custom_call.1} parent=1 // pred_region
      %23 = dma.done [#allocation3], 1024
    $region13: #{tpu_custom_call.1} parent=1 // pred_fallthru
      _
    %v24 = vlaneseq
    %v25 = vand.u32 %v24, 127
    %v26 = vld [vmem:[%s0] sm:$0xff]
    %v27 = vld [vmem:[%s0 + $0x8] sm:$0xff]
    %28 = vset.pattern.permute.xlu0 0
    %29 = vperm.xlu0 %28, %v26
    %v30 = vpop.permute.xlu0 %29
    %31 = vset.pattern.permute.xlu0 0
    %32 = vperm.xlu0 %31, %v27
    %v33 = vpop.permute.xlu0 %32
    %vm34 = vcmp.eq.s32.totalorder %v25, %v30
    %vm35 = vcmp.eq.s32.totalorder %v25, %v33
    %v36 = vsel %vm34, 1, 0
    %v37 = vsel %vm35, 1, 0
    %v38 = vcvt.s32.f32 %v36
    %v39 = vcvt.s32.f32 %v37
    %v40 = vld [vmem:[#allocation2] sm:$0xff]
    %v41 = vld [vmem:[#allocation2 + $0x8] sm:$0xff]
    %v42 = vld [vmem:[#allocation2 + $0x10] sm:$0xff]
    %v43 = vld [vmem:[#allocation2 + $0x18] sm:$0xff]
    %v44 = vld [vmem:[#allocation2 + $0x20] sm:$0xff]
    %v45 = vld [vmem:[#allocation2 + $0x28] sm:$0xff]
    %v46 = vld [vmem:[#allocation2 + $0x30] sm:$0xff]
    %v47 = vld [vmem:[#allocation2 + $0x38] sm:$0xff]
    %vm48 = vcmask 64512
    %v50 = vsel %vm48, %v38, 0
    %v53 = vsel %vm48, %v39, 0
    %55 = vmatprep.subr.mxu0 0.0
    %56 = vmatpush1.msra.mxu0 0.0
    %57 = vmatprep.subr.mxu0 0.0
    %58 = vmatpush1.msra.mxu0 0.0
    %59 = vmatprep.subr.mxu0 0.0
    %60 = vmatpush1.msra.mxu0 0.0
    %61 = vmatprep.subr.mxu0 0.0
    %62 = vmatpush1.msra.mxu0 0.0
    %63 = vmatprep.subr.mxu0 0.0
    %64 = vmatpush1.msra.mxu0 0.0
    %65 = vmatprep.subr.mxu0 0.0
    %66 = vmatpush1.msra.mxu0 0.0
    %67 = vmatprep.subr.mxu0 0.0
    %68 = vmatpush1.msra.mxu0 0.0
    %69 = vmatprep.subr.mxu0 0.0
    %70 = vmatpush1.msra.mxu0 0.0
    %71 = vmatprep.subr.mxu0 0.0
    %72 = vmatpush1.msra.mxu0 0.0
    %73 = vmatprep.subr.mxu0 0.0
    %74 = vmatpush1.msra.mxu0 0.0
    %75 = vmatprep.subr.mxu0 0.0
    %76 = vmatpush1.msra.mxu0 0.0
    %77 = vmatprep.subr.mxu0 0.0
    %78 = vmatpush1.msra.mxu0 0.0
    %79 = vmatprep.subr.mxu0 0.0
    %80 = vmatpush1.msra.mxu0 0.0
    %81 = vmatprep.subr.mxu0 0.0
    %82 = vmatpush1.msra.mxu0 0.0
    %83 = vmatprep.subr.mxu0 0.0
    %84 = vmatpush1.msra.mxu0 0.0
    %85 = vmatprep.subr.mxu0 %v41
    %86 = vmatpush1.msra.mxu0 %v40
    %87 = vmatprep.subr.mxu0 0.0
    %88 = vmatpush2.msra.mxu0 0.0
    %89 = vmatprep.subr.mxu0 0.0
    %90 = vmatpush2.msra.mxu0 0.0
    %91 = vmatprep.subr.mxu0 0.0
    %92 = vmatpush2.msra.mxu0 0.0
    %93 = vmatprep.subr.mxu0 0.0
    %94 = vmatpush2.msra.mxu0 0.0
    %95 = vmatprep.subr.mxu0 0.0
    %96 = vmatpush2.msra.mxu0 0.0
    %97 = vmatprep.subr.mxu0 0.0
    %98 = vmatpush2.msra.mxu0 0.0
    %99 = vmatprep.subr.mxu0 0.0
    %100 = vmatpush2.msra.mxu0 0.0
    %101 = vmatprep.subr.mxu0 0.0
    %102 = vmatpush2.msra.mxu0 0.0
    %103 = vmatprep.subr.mxu0 0.0
    %104 = vmatpush2.msra.mxu0 0.0
    %105 = vmatprep.subr.mxu0 0.0
    %106 = vmatpush2.msra.mxu0 0.0
    %107 = vmatprep.subr.mxu0 0.0
    %108 = vmatpush2.msra.mxu0 0.0
    %109 = vmatprep.subr.mxu0 0.0
    %110 = vmatpush2.msra.mxu0 0.0
    %111 = vmatprep.subr.mxu0 0.0
    %112 = vmatpush2.msra.mxu0 0.0
    %113 = vmatprep.subr.mxu0 0.0
    %114 = vmatpush2.msra.mxu0 0.0
    %115 = vmatprep.subr.mxu0 0.0
    %116 = vmatpush2.msra.mxu0 0.0
    %117 = vmatprep.subr.mxu0 0.0
    %118 = vmatpush2.msra.mxu0 0.0
    %119 = vmatprep.mubr.f32.mxu0 0.0
    %120 = vmatmul.mubr.f32.gmra.mxu0 %v50
    %v121 = vpop.f32.mrf.mxu0
    %v122 = vadd.f32 0.0, %v121
    %v123 = vpop.f32.mrf.mxu0
    %v124 = vadd.f32 0.0, %v123
    %125 = vmatprep.mubr.f32.mxu0 0.0
    %126 = vmatmul.mubr.f32.gmra.mxu0 %v53
    %v127 = vpop.f32.mrf.mxu0
    %v128 = vadd.f32 0.0, %v127
    %v129 = vpop.f32.mrf.mxu0
    %v130 = vadd.f32 0.0, %v129
    %131 = vdwg.mxu0
    %132 = vmatprep.subr.mxu0 0.0
    %133 = vmatpush1.msra.mxu0 0.0
    %134 = vmatprep.subr.mxu0 0.0
    %135 = vmatpush1.msra.mxu0 0.0
    %136 = vmatprep.subr.mxu0 0.0
    %137 = vmatpush1.msra.mxu0 0.0
    %138 = vmatprep.subr.mxu0 0.0
    %139 = vmatpush1.msra.mxu0 0.0
    %140 = vmatprep.subr.mxu0 0.0
    %141 = vmatpush1.msra.mxu0 0.0
    %142 = vmatprep.subr.mxu0 0.0
    %143 = vmatpush1.msra.mxu0 0.0
    %144 = vmatprep.subr.mxu0 0.0
    %145 = vmatpush1.msra.mxu0 0.0
    %146 = vmatprep.subr.mxu0 0.0
    %147 = vmatpush1.msra.mxu0 0.0
    %148 = vmatprep.subr.mxu0 0.0
    %149 = vmatpush1.msra.mxu0 0.0
    %150 = vmatprep.subr.mxu0 0.0
    %151 = vmatpush1.msra.mxu0 0.0
    %152 = vmatprep.subr.mxu0 0.0
    %153 = vmatpush1.msra.mxu0 0.0
    %154 = vmatprep.subr.mxu0 0.0
    %155 = vmatpush1.msra.mxu0 0.0
    %156 = vmatprep.subr.mxu0 0.0
    %157 = vmatpush1.msra.mxu0 0.0
    %158 = vmatprep.subr.mxu0 0.0
    %159 = vmatpush1.msra.mxu0 0.0
    %160 = vmatprep.subr.mxu0 0.0
    %161 = vmatpush1.msra.mxu0 0.0
    %162 = vmatprep.subr.mxu0 %v43
    %163 = vmatpush1.msra.mxu0 %v42
    %164 = vmatprep.subr.mxu0 0.0
    %165 = vmatpush2.msra.mxu0 0.0
    %166 = vmatprep.subr.mxu0 0.0
    %167 = vmatpush2.msra.mxu0 0.0
    %168 = vmatprep.subr.mxu0 0.0
    %169 = vmatpush2.msra.mxu0 0.0
    %170 = vmatprep.subr.mxu0 0.0
    %171 = vmatpush2.msra.mxu0 0.0
    %172 = vmatprep.subr.mxu0 0.0
    %173 = vmatpush2.msra.mxu0 0.0
    %174 = vmatprep.subr.mxu0 0.0
    %175 = vmatpush2.msra.mxu0 0.0
    %176 = vmatprep.subr.mxu0 0.0
    %177 = vmatpush2.msra.mxu0 0.0
    %178 = vmatprep.subr.mxu0 0.0
    %179 = vmatpush2.msra.mxu0 0.0
    %180 = vmatprep.subr.mxu0 0.0
    %181 = vmatpush2.msra.mxu0 0.0
    %182 = vmatprep.subr.mxu0 0.0
    %183 = vmatpush2.msra.mxu0 0.0
    %184 = vmatprep.subr.mxu0 0.0
    %185 = vmatpush2.msra.mxu0 0.0
    %186 = vmatprep.subr.mxu0 0.0
    %187 = vmatpush2.msra.mxu0 0.0
    %188 = vmatprep.subr.mxu0 0.0
    %189 = vmatpush2.msra.mxu0 0.0
    %190 = vmatprep.subr.mxu0 0.0
    %191 = vmatpush2.msra.mxu0 0.0
    %192 = vmatprep.subr.mxu0 0.0
    %193 = vmatpush2.msra.mxu0 0.0
    %194 = vmatprep.subr.mxu0 0.0
    %195 = vmatpush2.msra.mxu0 0.0
    %196 = vmatprep.mubr.f32.mxu0 0.0
    %197 = vmatmul.mubr.f32.gmra.mxu0 %v50
    %v198 = vpop.f32.mrf.mxu0
    %v199 = vadd.f32 0.0, %v198
    %v200 = vpop.f32.mrf.mxu0
    %v201 = vadd.f32 0.0, %v200
    %202 = vmatprep.mubr.f32.mxu0 0.0
    %203 = vmatmul.mubr.f32.gmra.mxu0 %v53
    %v204 = vpop.f32.mrf.mxu0
    %v205 = vadd.f32 0.0, %v204
    %v206 = vpop.f32.mrf.mxu0
    %v207 = vadd.f32 0.0, %v206
    %208 = vdwg.mxu0
    %209 = vmatprep.subr.mxu0 0.0
    %210 = vmatpush1.msra.mxu0 0.0
    %211 = vmatprep.subr.mxu0 0.0
    %212 = vmatpush1.msra.mxu0 0.0
    %213 = vmatprep.subr.mxu0 0.0
    %214 = vmatpush1.msra.mxu0 0.0
    %215 = vmatprep.subr.mxu0 0.0
    %216 = vmatpush1.msra.mxu0 0.0
    %217 = vmatprep.subr.mxu0 0.0
    %218 = vmatpush1.msra.mxu0 0.0
    %219 = vmatprep.subr.mxu0 0.0
    %220 = vmatpush1.msra.mxu0 0.0
    %221 = vmatprep.subr.mxu0 0.0
    %222 = vmatpush1.msra.mxu0 0.0
    %223 = vmatprep.subr.mxu0 0.0
    %224 = vmatpush1.msra.mxu0 0.0
    %225 = vmatprep.subr.mxu0 0.0
    %226 = vmatpush1.msra.mxu0 0.0
    %227 = vmatprep.subr.mxu0 0.0
    %228 = vmatpush1.msra.mxu0 0.0
    %229 = vmatprep.subr.mxu0 0.0
    %230 = vmatpush1.msra.mxu0 0.0
    %231 = vmatprep.subr.mxu0 0.0
    %232 = vmatpush1.msra.mxu0 0.0
    %233 = vmatprep.subr.mxu0 0.0
    %234 = vmatpush1.msra.mxu0 0.0
    %235 = vmatprep.subr.mxu0 0.0
    %236 = vmatpush1.msra.mxu0 0.0
    %237 = vmatprep.subr.mxu0 0.0
    %238 = vmatpush1.msra.mxu0 0.0
    %239 = vmatprep.subr.mxu0 %v45
    %240 = vmatpush1.msra.mxu0 %v44
    %241 = vmatprep.subr.mxu0 0.0
    %242 = vmatpush2.msra.mxu0 0.0
    %243 = vmatprep.subr.mxu0 0.0
    %244 = vmatpush2.msra.mxu0 0.0
    %245 = vmatprep.subr.mxu0 0.0
    %246 = vmatpush2.msra.mxu0 0.0
    %247 = vmatprep.subr.mxu0 0.0
    %248 = vmatpush2.msra.mxu0 0.0
    %249 = vmatprep.subr.mxu0 0.0
    %250 = vmatpush2.msra.mxu0 0.0
    %251 = vmatprep.subr.mxu0 0.0
    %252 = vmatpush2.msra.mxu0 0.0
    %253 = vmatprep.subr.mxu0 0.0
    %254 = vmatpush2.msra.mxu0 0.0
    %255 = vmatprep.subr.mxu0 0.0
    %256 = vmatpush2.msra.mxu0 0.0
    %257 = vmatprep.subr.mxu0 0.0
    %258 = vmatpush2.msra.mxu0 0.0
    %259 = vmatprep.subr.mxu0 0.0
    %260 = vmatpush2.msra.mxu0 0.0
    %261 = vmatprep.subr.mxu0 0.0
    %262 = vmatpush2.msra.mxu0 0.0
    %263 = vmatprep.subr.mxu0 0.0
    %264 = vmatpush2.msra.mxu0 0.0
    %265 = vmatprep.subr.mxu0 0.0
    %266 = vmatpush2.msra.mxu0 0.0
    %267 = vmatprep.subr.mxu0 0.0
    %268 = vmatpush2.msra.mxu0 0.0
    %269 = vmatprep.subr.mxu0 0.0
    %270 = vmatpush2.msra.mxu0 0.0
    %271 = vmatprep.subr.mxu0 0.0
    %272 = vmatpush2.msra.mxu0 0.0
    %273 = vmatprep.mubr.f32.mxu0 0.0
    %274 = vmatmul.mubr.f32.gmra.mxu0 %v50
    %v275 = vpop.f32.mrf.mxu0
    %v276 = vadd.f32 0.0, %v275
    %v277 = vpop.f32.mrf.mxu0
    %v278 = vadd.f32 0.0, %v277
    %279 = vmatprep.mubr.f32.mxu0 0.0
    %280 = vmatmul.mubr.f32.gmra.mxu0 %v53
    %v281 = vpop.f32.mrf.mxu0
    %v282 = vadd.f32 0.0, %v281
    %v283 = vpop.f32.mrf.mxu0
    %v284 = vadd.f32 0.0, %v283
    %285 = vdwg.mxu0
    %286 = vmatprep.subr.mxu0 0.0
    %287 = vmatpush1.msra.mxu0 0.0
    %288 = vmatprep.subr.mxu0 0.0
    %289 = vmatpush1.msra.mxu0 0.0
    %290 = vmatprep.subr.mxu0 0.0
    %291 = vmatpush1.msra.mxu0 0.0
    %292 = vmatprep.subr.mxu0 0.0
    %293 = vmatpush1.msra.mxu0 0.0
    %294 = vmatprep.subr.mxu0 0.0
    %295 = vmatpush1.msra.mxu0 0.0
    %296 = vmatprep.subr.mxu0 0.0
    %297 = vmatpush1.msra.mxu0 0.0
    %298 = vmatprep.subr.mxu0 0.0
    %299 = vmatpush1.msra.mxu0 0.0
    %300 = vmatprep.subr.mxu0 0.0
    %301 = vmatpush1.msra.mxu0 0.0
    %302 = vmatprep.subr.mxu0 0.0
    %303 = vmatpush1.msra.mxu0 0.0
    %304 = vmatprep.subr.mxu0 0.0
    %305 = vmatpush1.msra.mxu0 0.0
    %306 = vmatprep.subr.mxu0 0.0
    %307 = vmatpush1.msra.mxu0 0.0
    %308 = vmatprep.subr.mxu0 0.0
    %309 = vmatpush1.msra.mxu0 0.0
    %310 = vmatprep.subr.mxu0 0.0
    %311 = vmatpush1.msra.mxu0 0.0
    %312 = vmatprep.subr.mxu0 0.0
    %313 = vmatpush1.msra.mxu0 0.0
    %314 = vmatprep.subr.mxu0 0.0
    %315 = vmatpush1.msra.mxu0 0.0
    %316 = vmatprep.subr.mxu0 %v47
    %317 = vmatpush1.msra.mxu0 %v46
    %318 = vmatprep.subr.mxu0 0.0
    %319 = vmatpush2.msra.mxu0 0.0
    %320 = vmatprep.subr.mxu0 0.0
    %321 = vmatpush2.msra.mxu0 0.0
    %322 = vmatprep.subr.mxu0 0.0
    %323 = vmatpush2.msra.mxu0 0.0
    %324 = vmatprep.subr.mxu0 0.0
    %325 = vmatpush2.msra.mxu0 0.0
    %326 = vmatprep.subr.mxu0 0.0
    %327 = vmatpush2.msra.mxu0 0.0
    %328 = vmatprep.subr.mxu0 0.0
    %329 = vmatpush2.msra.mxu0 0.0
    %330 = vmatprep.subr.mxu0 0.0
    %331 = vmatpush2.msra.mxu0 0.0
    %332 = vmatprep.subr.mxu0 0.0
    %333 = vmatpush2.msra.mxu0 0.0
    %334 = vmatprep.subr.mxu0 0.0
    %335 = vmatpush2.msra.mxu0 0.0
    %336 = vmatprep.subr.mxu0 0.0
    %337 = vmatpush2.msra.mxu0 0.0
    %338 = vmatprep.subr.mxu0 0.0
    %339 = vmatpush2.msra.mxu0 0.0
    %340 = vmatprep.subr.mxu0 0.0
    %341 = vmatpush2.msra.mxu0 0.0
    %342 = vmatprep.subr.mxu0 0.0
    %343 = vmatpush2.msra.mxu0 0.0
    %344 = vmatprep.subr.mxu0 0.0
    %345 = vmatpush2.msra.mxu0 0.0
    %346 = vmatprep.subr.mxu0 0.0
    %347 = vmatpush2.msra.mxu0 0.0
    %348 = vmatprep.subr.mxu0 0.0
    %349 = vmatpush2.msra.mxu0 0.0
    %350 = vmatprep.mubr.f32.mxu0 0.0
    %351 = vmatmul.mubr.f32.gmra.mxu0 %v50
    %v352 = vpop.f32.mrf.mxu0
    %v353 = vadd.f32 0.0, %v352
    %v354 = vpop.f32.mrf.mxu0
    %v355 = vadd.f32 0.0, %v354
    %356 = vmatprep.mubr.f32.mxu0 0.0
    %357 = vmatmul.mubr.f32.gmra.mxu0 %v53
    %v358 = vpop.f32.mrf.mxu0
    %v359 = vadd.f32 0.0, %v358
    %v360 = vpop.f32.mrf.mxu0
    %v361 = vadd.f32 0.0, %v360
    %362 = vdwg.mxu0
    %363 = vst [vmem:[#allocation5] sm:$0xff] %v122
    %364 = vst [vmem:[#allocation5 + $0x8] sm:$0xff] %v124
    %365 = vst [vmem:[#allocation5 + $0x10] sm:$0xff] %v199
    %366 = vst [vmem:[#allocation5 + $0x18] sm:$0xff] %v201
    %367 = vst [vmem:[#allocation5 + $0x20] sm:$0xff] %v276
    %368 = vst [vmem:[#allocation5 + $0x28] sm:$0xff] %v278
    %369 = vst [vmem:[#allocation5 + $0x30] sm:$0xff] %v353
    %370 = vst [vmem:[#allocation5 + $0x38] sm:$0xff] %v355
    %371 = vst [vmem:[#allocation5 + $0x40] sm:$0xff] %v128
    %372 = vst [vmem:[#allocation5 + $0x48] sm:$0xff] %v130
    %373 = vst [vmem:[#allocation5 + $0x50] sm:$0xff] %v205
    %374 = vst [vmem:[#allocation5 + $0x58] sm:$0xff] %v207
    %375 = vst [vmem:[#allocation5 + $0x60] sm:$0xff] %v282
    %376 = vst [vmem:[#allocation5 + $0x68] sm:$0xff] %v284
    %377 = vst [vmem:[#allocation5 + $0x70] sm:$0xff] %v359
    %378 = vst [vmem:[#allocation5 + $0x78] sm:$0xff] %v361
    // Predicated region
    $region14: #{tpu_custom_call.1} parent=1 // pred_check
      _
    $region15: #{tpu_custom_call.1} parent=1 // pred_check_branch
      %380 = sbr.rel (0) target = $region17
    $region16: #{tpu_custom_call.1} parent=1 // pred_region
      %s382 = ssub.s32 2048, 2048
      %383 = vsyncadd [#allocation4], %s382
      %s384 = sshll.u32 [#allocation5], 4
      %s385 = int_to_ptr.vmem [resolvable:$true] %s384
      %390 = dma.vmem_to_hbm [thread:$0]  %s385, 2048, %s2, [#allocation4], 1024, 1024, 64
    $region17: #{tpu_custom_call.1} parent=1 // pred_fallthru
      _
    // Predicated region
    $region18: #{tpu_custom_call.1} parent=1 // pred_check
      _
    $region19: #{tpu_custom_call.1} parent=1 // pred_check_branch
      %392 = sbr.rel (0) target = $region21
    $region20: #{tpu_custom_call.1} parent=1 // pred_region
      %393 = dma.done [#allocation4], 2048
    $region21: #{tpu_custom_call.1} parent=1 // pred_fallthru
      _
    %394 = vsyncpa [#allocation3], 1
    %395 = vsyncpa [#allocation4], 1

</llo_original>
